<compile_context>
chip_gen: v5e
topology: v5e:2x2
jax: 0.10.0
libtpu: 0.0.40
codegen_flags: <defaults>
</compile_context>

<pallas_src>
import jax
import jax.numpy as jnp
from jax import lax
from jax.experimental import pallas as pl
from jax.experimental.pallas import tpu as pltpu

_LANE = 128
_SUBLANE = 8


def _round_up(x: int, m: int) -> int:
    return ((x + m - 1) // m) * m


def _round_down(x: int, m: int) -> int:
    return (x // m) * m


def _vmem_ceiling_bytes() -> int:
    """Generation-aware scoped-VMEM ceiling (conservative fallback = v7x)."""
    cap = 64 * 1024 * 1024
    try:
        info = pltpu.get_tpu_info()
        c = getattr(info, "vmem_capacity_bytes", None)
        if c:
            cap = int(c)
    except Exception:
        pass
    return min((cap * 3) // 4, 96 * 1024 * 1024)


def _default_block_budget(ceiling: int) -> int:
    # Double-buffered input + possible f32 temp + headroom must fit the ceiling.
    budget = (ceiling - (8 << 20)) // 3
    budget = (budget >> 20) << 20
    return int(min(24 << 20, max(4 << 20, budget)))


def _choose_tiles(R: int, S: int, budget_bytes: int):
    """Pick (row_tile, col_tile). Blocks sized in f32-equivalent elements."""
    max_elems = max(budget_bytes // 4, _LANE * _SUBLANE)

    if S * min(R, _LANE) <= max_elems:
        # Full width fits: single column step, grow rows as far as budget allows.
        row_cap = max_elems // S
        if R <= row_cap:
            row_tile = R
        else:
            row_tile = max(_LANE, _round_down(row_cap, _LANE))
        # v7x megacore: ensure >= 2 row blocks when R is splittable (>=256).
        if R >= 2 * _LANE and row_tile >= R:
            row_tile = _round_up(-(-R // 2), _LANE)
        return row_tile, S

    # Huge S: keep rows minimal, columns (contiguous in HBM) as large as possible.
    row_tile = min(R, _LANE)
    col_cap = max(_LANE, _round_down(max_elems // row_tile, _LANE))
    col_tile = min(col_cap, S)
    return row_tile, col_tile


def _vmem_limit_bytes(row_tile, col_tile, itemsize, scratch_bytes, ceiling) -> int:
    in_block = row_tile * col_tile * itemsize          # one pipeline buffer
    f32_temp = row_tile * col_tile * 4                 # possible in-kernel f32 temp
    out_block = 2 * row_tile * max(itemsize, 4)
    footprint = 2 * in_block + f32_temp + 2 * out_block + scratch_bytes + (4 << 20)
    return int(min(max(footprint, 16 << 20), ceiling))


# --------------------------------------------------------------------------- #
# Kernels
# --------------------------------------------------------------------------- #

def _make_single_pass_kernel(n_cols: int):
    """col_tile == S: reduce each block fully, no cross-step accumulation."""
    inv_area = 1.0 / float(n_cols)

    def kernel(x_ref, out_ref):
        x = x_ref[...]
        row_sum = jnp.sum(x.astype(jnp.float32), axis=-1)   # f32 accumulation
        row_max = jnp.max(x, axis=-1)                        # exact in any dtype
        out_ref[0, :] = (row_sum * inv_area).astype(out_ref.dtype)
        out_ref[1, :] = row_max.astype(out_ref.dtype)

    return kernel


def _make_chunked_kernel(row_tile: int, col_tile: int, n_cols: int,
                         n_col_blocks: int):
    """col_tile < S: accumulate (row_tile,128) partials across column steps."""
    inv_area = 1.0 / float(n_cols)
    n_chunks = col_tile // _LANE
    last_j = n_col_blocks - 1
    rem = n_cols - last_j * col_tile          # valid columns in the tail step
    rem_full = rem // _LANE                   # full 128-lane chunks in the tail
    rem_part = rem % _LANE                    # width of the partial tail chunk
    tail_full = (rem == col_tile)
    sub_rows = min(row_tile, 32)              # keeps live accumulators in vregs

    def _fold(x_ref, max_acc, sum_acc, full_chunks: int, part_width: int):
        for r0 in range(0, row_tile, sub_rows):
            sub = min(sub_rows, row_tile - r0)
            m = max_acc[pl.ds(r0, sub), :]
            s = sum_acc[pl.ds(r0, sub), :]

            if full_chunks > 0:
                if full_chunks <= 8:
                    for c in range(full_chunks):
                        chunk = x_ref[pl.ds(r0, sub),
                                      c * _LANE:(c + 1) * _LANE].astype(jnp.float32)
                        m = jnp.maximum(m, chunk)
                        s = s + chunk
                else:
                    def body(c, carry):
                        mc, sc = carry
                        off = pl.multiple_of(c * _LANE, _LANE)
                        chunk = x_ref[pl.ds(r0, sub),
                                      pl.ds(off, _LANE)].astype(jnp.float32)
                        return jnp.maximum(mc, chunk), sc + chunk

                    m, s = lax.fori_loop(0, full_chunks, body, (m, s), unroll=4)

            if part_width > 0:   # masked partial chunk (tail step only)
                c = full_chunks
                chunk = x_ref[pl.ds(r0, sub),
                              c * _LANE:(c + 1) * _LANE].astype(jnp.float32)
                lane = lax.broadcasted_iota(jnp.int32, chunk.shape, 1)
                valid = lane < part_width
                m = jnp.maximum(m, jnp.where(valid, chunk, -jnp.inf))
                s = s + jnp.where(valid, chunk, 0.0)

            max_acc[pl.ds(r0, sub), :] = m
            sum_acc[pl.ds(r0, sub), :] = s

    def kernel(x_ref, out_ref, max_acc, sum_acc):
        j = pl.program_id(1)

        @pl.when(j == 0)
        def _init():
            max_acc[...] = jnp.full_like(max_acc, -jnp.inf)
            sum_acc[...] = jnp.zeros_like(sum_acc)

        if tail_full:
            _fold(x_ref, max_acc, sum_acc, n_chunks, 0)
        else:
            @pl.when(j != last_j)
            def _body():
                _fold(x_ref, max_acc, sum_acc, n_chunks, 0)

            @pl.when(j == last_j)
            def _tail():
                _fold(x_ref, max_acc, sum_acc, rem_full, rem_part)

        @pl.when(j == last_j)
        def _finalize():
            s = sum_acc[...]
            m = max_acc[...]
            out_ref[0, :] = (jnp.sum(s, axis=-1) * inv_area).astype(out_ref.dtype)
            out_ref[1, :] = jnp.max(m, axis=-1).astype(out_ref.dtype)

    return kernel


# --------------------------------------------------------------------------- #
# Wrapper
# --------------------------------------------------------------------------- #

def _catavgmax_rows(x2d: jax.Array, *, block_budget_bytes=None) -> jax.Array:
    """Fused row-wise (avg, max) of a 2-D array [R, S] -> (2, R) slab."""
    R, S = x2d.shape
    dtype = x2d.dtype
    itemsize = jnp.dtype(dtype).itemsize

    ceiling = _vmem_ceiling_bytes()
    if block_budget_bytes is None:
        block_budget_bytes = _default_block_budget(ceiling)
    block_budget_bytes = max(int(block_budget_bytes), _LANE * _SUBLANE * 4)

    row_tile, col_tile = _choose_tiles(R, S, block_budget_bytes)
    n_row = pl.cdiv(R, row_tile)

    cost = pl.CostEstimate(flops=2 * R * S, transcendentals=0,
                           bytes_accessed=R * S * itemsize + 2 * R * itemsize)

    if col_tile >= S:
        # Fast path: no scratch, 1-D grid, full-width reduction per block.
        vmem_limit = _vmem_limit_bytes(row_tile, S, itemsize, 0, ceiling)
        return pl.pallas_call(
            _make_single_pass_kernel(S),
            out_shape=jax.ShapeDtypeStruct((2, R), dtype),
            grid_spec=pltpu.PrefetchScalarGridSpec(
                num_scalar_prefetch=0,
                grid=(n_row,),
                in_specs=[pl.BlockSpec((row_tile, S), lambda i: (i, 0))],
                out_specs=pl.BlockSpec((2, row_tile), lambda i: (0, i)),
            ),
            compiler_params=pltpu.CompilerParams(
                dimension_semantics=("parallel",),
                vmem_limit_bytes=vmem_limit),
            cost_estimate=cost,
        )(x2d)

    # Chunked path (very large H*W): accumulate across column steps.
    n_col = pl.cdiv(S, col_tile)
    scratch_bytes = 2 * row_tile * _LANE * 4
    vmem_limit = _vmem_limit_bytes(row_tile, col_tile, itemsize,
                                   scratch_bytes, ceiling)
    return pl.pallas_call(
        _make_chunked_kernel(row_tile, col_tile, S, n_col),
        out_shape=jax.ShapeDtypeStruct((2, R), dtype),
        grid_spec=pltpu.PrefetchScalarGridSpec(
            num_scalar_prefetch=0,
            grid=(n_row, n_col),
            in_specs=[pl.BlockSpec((row_tile, col_tile), lambda i, j: (i, j))],
            out_specs=pl.BlockSpec((2, row_tile), lambda i, j: (0, i)),
            scratch_shapes=[pltpu.VMEM((row_tile, _LANE), jnp.float32),
                            pltpu.VMEM((row_tile, _LANE), jnp.float32)],
        ),
        compiler_params=pltpu.CompilerParams(
            dimension_semantics=("parallel", "arbitrary"),
            vmem_limit_bytes=vmem_limit),
        cost_estimate=cost,
    )(x2d)


def _is_global(output_size) -> bool:
    if isinstance(output_size, int):
        return output_size == 1
    if isinstance(output_size, (tuple, list)):
        return all(int(o) == 1 for o in output_size)
    return False


def adaptive_catavgmax_pool2d(x: jax.Array, output_size=1, *,
                              block_budget_bytes=None) -> jax.Array:
    """JAX/Pallas equivalent of timm adaptive_catavgmax_pool2d (output_size=1)."""
    if not _is_global(output_size):
        # TODO(synk): general adaptive output_size > 1 needs a bin-partitioned
        # pooling kernel; only global pooling (output_size=1) is implemented.
        raise NotImplementedError("Only output_size=1 is supported.")
    N, C, H, W = x.shape
    x2d = x.reshape(N * C, H * W)
    pooled = _catavgmax_rows(x2d, block_budget_bytes=block_budget_bytes)  # (2, N*C)
    x_avg = pooled[0].reshape(N, C, 1, 1)
    x_max = pooled[1].reshape(N, C, 1, 1)
    return jnp.concatenate((x_avg, x_max), axis=1)  # (N, 2*C, 1, 1)


class AdaptiveCatAvgMaxPool2d:
    """Mirror of the PyTorch module's forward pass."""

    def __init__(self, output_size=1):
        self.output_size = output_size

    def __call__(self, x):
        return adaptive_catavgmax_pool2d(x, self.output_size)


if __name__ == "__main__":
    def _ref(x):
        xf = x.astype(jnp.float32)
        avg = jnp.mean(xf, axis=(2, 3), keepdims=True)
        mx = jnp.max(xf, axis=(2, 3), keepdims=True)
        return jnp.concatenate((avg, mx), axis=1).astype(x.dtype)

    # Primary shape: N=2, C=4, H=W=16 -> output (2, 8, 1, 1). Fast path.
    x = jax.random.normal(jax.random.PRNGKey(0), (2, 4, 16, 16), dtype=jnp.float32)
    mod = AdaptiveCatAvgMaxPool2d(1)
    y = jax.block_until_ready(mod(x))
    assert y.shape == (2, 8, 1, 1), y.shape
    assert jnp.allclose(y, _ref(x), atol=1e-5, rtol=1e-5), "mismatch vs reference"

    # Row tiling with >=2 row blocks and a masked tail row block (R=288 -> 256+32).
    x2 = jax.random.normal(jax.random.PRNGKey(1), (2, 144, 4, 4), dtype=jnp.float32)
    y2 = jax.block_until_ready(adaptive_catavgmax_pool2d(x2, (1, 1)))
    assert y2.shape == (2, 288, 1, 1), y2.shape
    assert jnp.allclose(y2, _ref(x2), atol=1e-5, rtol=1e-5), "mismatch (row tiling)"

    # Chunked column path: tiny budget forces column tiling, the fori_loop fold
    # (n_chunks > 8) and a masked partial tail chunk (S=1600, col_tile=1280).
    x3 = jax.random.normal(jax.random.PRNGKey(2), (1, 2, 40, 40), dtype=jnp.float32)
    y3 = jax.block_until_ready(
        adaptive_catavgmax_pool2d(x3, 1, block_budget_bytes=10 * 1024))
    assert y3.shape == (1, 4, 1, 1), y3.shape
    assert jnp.allclose(y3, _ref(x3), atol=1e-5, rtol=1e-5), "mismatch (chunked/fori)"

    # Small chunked case: one full chunk + masked partial chunk (S=169).
    x4 = jax.random.normal(jax.random.PRNGKey(3), (2, 4, 13, 13), dtype=jnp.float32)
    y4 = jax.block_until_ready(
        adaptive_catavgmax_pool2d(x4, 1, block_budget_bytes=4096))
    assert jnp.allclose(y4, _ref(x4), atol=1e-5, rtol=1e-5), "mismatch (chunked/tail)"

    # bf16 inputs pass straight through (halves HBM traffic); f32 accumulation.
    x5 = jax.random.normal(jax.random.PRNGKey(4), (2, 4, 16, 16)).astype(jnp.bfloat16)
    y5 = jax.block_until_ready(adaptive_catavgmax_pool2d(x5, 1))
    assert y5.dtype == jnp.bfloat16
    assert jnp.allclose(y5.astype(jnp.float32), _ref(x5).astype(jnp.float32),
                        atol=3e-2, rtol=3e-2), "mismatch (bf16)"

    print("KERNEL_OK")
</pallas_src>

<mosaic_0001>
module attributes {stable_mosaic.version = 11 : i64} {
  func.func @kernel(%arg0: i32, %arg1: memref<8x256xf32, #tpu.memory_space<vmem>>, %arg2: memref<2x8xf32, #tpu.memory_space<vmem>>) attributes {dimension_semantics = [#tpu.dimension_semantics<parallel>], iteration_bounds = array<i64: 1>, scalar_prefetch = 0 : i64, scratch_operands = 0 : i64, tpu.core_type = #tpu.core_type<tc>, window_params = [{transform_indices = @transform_0, window_bounds = array<i64: 8, 256>}, {transform_indices = @transform_1, window_bounds = array<i64: 2, 8>}]} {
    %c0 = arith.constant 0 : index
    %c0_0 = arith.constant 0 : index
    %0 = vector.load %arg1[%c0, %c0_0] : memref<8x256xf32, #tpu.memory_space<vmem>>, vector<8x256xf32>
    %cst = arith.constant dense<0.000000e+00> : vector<8xf32>
    %1 = vector.multi_reduction <add>, %0, %cst [1] : vector<8x256xf32> to vector<8xf32>
    %cst_1 = arith.constant dense<0xFF800000> : vector<8xf32>
    %2 = vector.multi_reduction <maximumf>, %0, %cst_1 [1] : vector<8x256xf32> to vector<8xf32>
    %cst_2 = arith.constant 3.906250e-03 : f32
    %3 = vector.broadcast %cst_2 : f32 to vector<8xf32>
    %4 = arith.mulf %1, %3 : vector<8xf32>
    %c0_3 = arith.constant 0 : index
    %c0_4 = arith.constant 0 : index
    %5 = vector.load %arg2[%c0_3, %c0_4] : memref<2x8xf32, #tpu.memory_space<vmem>>, vector<1x8xf32>
    %6 = vector.shape_cast %5 : vector<1x8xf32> to vector<8xf32>
    %7 = vector.shape_cast %4 : vector<8xf32> to vector<1x8xf32>
    tpu.vector_store %arg2[%c0_3, %c0_4], %7 {strides = array<i32>} : memref<2x8xf32, #tpu.memory_space<vmem>>, vector<1x8xf32>,
    %c1 = arith.constant 1 : index
    %c0_5 = arith.constant 0 : index
    %8 = vector.load %arg2[%c1, %c0_5] : memref<2x8xf32, #tpu.memory_space<vmem>>, vector<1x8xf32>
    %9 = vector.shape_cast %8 : vector<1x8xf32> to vector<8xf32>
    %10 = vector.shape_cast %2 : vector<8xf32> to vector<1x8xf32>
    tpu.vector_store %arg2[%c1, %c0_5], %10 {strides = array<i32>} : memref<2x8xf32, #tpu.memory_space<vmem>>, vector<1x8xf32>,
    return
  }
  func.func @transform_0(%arg0: i32) -> (i32, i32) {
    %c0_i32 = arith.constant 0 : i32
    %c0_i32_0 = arith.constant 0 : i32
    return %arg0, %c0_i32 : i32, i32
  }
  func.func @transform_1(%arg0: i32) -> (i32, i32) {
    %c0_i32 = arith.constant 0 : i32
    %c0_i32_0 = arith.constant 0 : i32
    return %c0_i32, %arg0 : i32, i32
  }
}

</mosaic_0001>

<llo_original>
// kernel: tpu_custom_call.1
$region0: #{tpu_custom_call.1}
  #allocation0 [shape = 'u32[]', space=smem, size = 0x4, offset = 0x4, fixed_abs, tag = 'smem constant byte address 0x4 - core index']
  #allocation1 [shape = 'u32[72,128]{1,0:T(1,128)}', space=vmem, size = 0x9000, scoped, tag = 'internal scratch']
  %s0 = inlined_call_operand.hbm [shape: f32[8,256], index: 0, kind: input, shape index: {}]
  %s1 = inlined_call_operand.hbm [shape: f32[2,8], index: 1, kind: output, shape index: {}]
  %s2 = sld [smem:[#allocation0]]
  $region18: #{tpu_custom_call.1} parent=0
    _
  %s4 = ssub.s32 1, %s2
  %s5 = scalar_select 0, %s4, %s2
  $region1: #{tpu_custom_call.1} parent=0
    #allocation2 [shape = 'u8[8192]{0}', space=vmem, size = 0x2000, scoped, tag = 'input window, operand 0, single buffered']
    #allocation3 [shape = 's32[1]{0}', space=sflag, size = 0x4, scoped, tag = 'scoped memory for tpu_custom_call.1']
    #allocation4 [shape = 's32[1]{0}', space=sflag, size = 0x4, scoped, tag = 'scoped memory for tpu_custom_call.1']
    #allocation5 [shape = 'u8[1024]{0}', space=vmem, size = 0x400, scoped, tag = 'output window, operand 0, single buffered']
    %6 = vsyncpa [#allocation3], 0
    %7 = vsyncpa [#allocation4], 0
    // Predicated region
    $region2: #{tpu_custom_call.1} parent=1 // pred_check
      _
    $region3: #{tpu_custom_call.1} parent=1 // pred_check_branch
      %9 = sbr.rel (0) target = $region5
    $region4: #{tpu_custom_call.1} parent=1 // pred_region
      %11 = vsyncadd [#allocation3], 0
      %s13 = sshll.u32 %s0, 4
      %s14 = int_to_ptr.hbm [resolvable:$true] %s13
      %s15 = sshll.u32 [#allocation2], 4
      %s16 = int_to_ptr.vmem [resolvable:$true] %s15
      %18 = dma.hbm_to_vmem [thread:$0]  %s14, 256, %s16, [#allocation3]
    $region5: #{tpu_custom_call.1} parent=1 // pred_fallthru
      _
    // Predicated region
    $region6: #{tpu_custom_call.1} parent=1 // pred_check
      _
    $region7: #{tpu_custom_call.1} parent=1 // pred_check_branch
      %20 = sbr.rel (0) target = $region9
    $region8: #{tpu_custom_call.1} parent=1 // pred_region
      %22 = dma.done [#allocation3], 256
    $region9: #{tpu_custom_call.1} parent=1 // pred_fallthru
      _
    %v23 = vld [vmem:[#allocation2] sm:$0xff]
    %v24 = vld [vmem:[#allocation2 + $0x8] sm:$0xff]
    %v25 = vadd.f32 %v23, %v24
    %26 = vadd.xlane.f32.xlu0 %v25
    %v27 = vpop.xlane.xlu0 %26
    %v28 = vmax.f32 %v23, %v24
    %29 = vmax.xlane.f32.xlu0 %v28
    %v30 = vpop.xlane.xlu0 %29
    %v31 = vmul.f32 %v27, 0.00390625
    %v33 = vlaneseq
    %v34 = vand.u32 %v33, 127
    %v35 = vperm.slane %v31, %v34
    %vm37 = vcmask 57344
    %38 = vst.msk [vmem:[#allocation5] sm:$0x1] %vm37, %v35
    %v40 = vperm.slane %v30, %v34
    %42 = vst.msk [vmem:[#allocation5 + $0x1] sm:$0x1] %vm37, %v40
    // Predicated region
    $region10: #{tpu_custom_call.1} parent=1 // pred_check
      _
    $region11: #{tpu_custom_call.1} parent=1 // pred_check_branch
      %44 = sbr.rel (0) target = $region13
    $region12: #{tpu_custom_call.1} parent=1 // pred_region
      %46 = vsyncadd [#allocation4], 0
      %s48 = sshll.u32 [#allocation5], 4
      %s49 = int_to_ptr.vmem [resolvable:$true] %s48
      %s50 = sshll.u32 %s1, 4
      %s51 = int_to_ptr.hbm [resolvable:$true] %s50
      %53 = dma.vmem_to_hbm [thread:$0]  %s49, 32, %s51, [#allocation4]
    $region13: #{tpu_custom_call.1} parent=1 // pred_fallthru
      _
    // Predicated region
    $region14: #{tpu_custom_call.1} parent=1 // pred_check
      _
    $region15: #{tpu_custom_call.1} parent=1 // pred_check_branch
      %55 = sbr.rel (0) target = $region17
    $region16: #{tpu_custom_call.1} parent=1 // pred_region
      %57 = dma.done [#allocation4], 32
    $region17: #{tpu_custom_call.1} parent=1 // pred_fallthru
      _
    %58 = vsyncpa [#allocation3], 1
    %59 = vsyncpa [#allocation4], 1

</llo_original>
